<compile_context>
chip_gen: v6e
topology: v6e:2x2x1
jax: 0.10.0
libtpu: 0.0.40
codegen_flags: <defaults>
</compile_context>

<pallas_src>
import functools
import math

import jax
import jax.numpy as jnp
from jax.experimental import pallas as pl
from jax.experimental.pallas import tpu as pltpu

LOG_STD_MAX = 2.0
LOG_STD_MIN = -20.0
_HALF_LOG_2PI = 0.5 * math.log(2.0 * math.pi)  # trace-time constant


def _round_up(n, m):
    return ((n + m - 1) // m) * m


def _policy_kernel(x_ref, w1_ref, b1_ref, w2_ref, b2_ref, wh_ref, bh_ref, eps_ref,
                   out_ref, *, a_dim, a_pad, output_limit):
    x = x_ref[...]

    # MLP trunk: relu(Linear) x2 (use_output_layer=False, use_actor=False)
    h1 = jnp.maximum(
        jnp.dot(x, w1_ref[...], preferred_element_type=jnp.float32) + b1_ref[...], 0.0)
    h2 = jnp.maximum(
        jnp.dot(h1, w2_ref[...], preferred_element_type=jnp.float32) + b2_ref[...], 0.0)

    # Fused mu / log_std heads: one MXU matmul, then split at a lane-aligned offset.
    heads = jnp.dot(h2, wh_ref[...], preferred_element_type=jnp.float32) + bh_ref[...]
    mu = heads[:, :a_pad]
    log_std_raw = jnp.tanh(heads[:, a_pad:])
    log_std = LOG_STD_MIN + 0.5 * (LOG_STD_MAX - LOG_STD_MIN) * (log_std_raw + 1.0)
    std = jnp.exp(log_std)

    # Reparameterized sample (rsample): pi = mu + std * eps,  eps ~ N(0, 1)
    eps = eps_ref[...]
    pi = mu + std * eps

    # Squashing
    mu_t = jnp.tanh(mu)
    pi_t = jnp.tanh(pi)
    # clip_but_pass_gradient(1 - pi^2, 0, 1): forward value is a plain clamp.
    # TODO(synk): if a custom VJP is ever added, implement the straight-through
    # gradient explicitly (jnp.clip zeros gradients outside the range).
    clipped = jnp.clip(1.0 - pi_t * pi_t, 0.0, 1.0)

    # Fused row reduction:
    #   Normal(mu, std).log_prob(pi) = -0.5*eps^2 - log_std - 0.5*log(2*pi)
    #   minus the squashing correction log(clipped + 1e-6), summed over action dims.
    per_elem = (-0.5 * eps * eps - log_std - _HALF_LOG_2PI) - jnp.log(clipped + 1e-6)
    lane = jax.lax.broadcasted_iota(jnp.int32, per_elem.shape, 1)
    per_elem = jnp.where(lane < a_dim, per_elem, 0.0)  # drop padded action columns
    log_pi = jnp.sum(per_elem, axis=-1, keepdims=True)

    tb = out_ref.shape[0]
    tail = out_ref.shape[1] - 2 * a_pad
    # Three lane-aligned (multiples of 128) full-width stores into the packed slab.
    out_ref[:, :a_pad] = mu_t * output_limit
    out_ref[:, a_pad:2 * a_pad] = pi_t * output_limit
    out_ref[:, 2 * a_pad:] = jnp.broadcast_to(log_pi, (tb, tail))


def reparam_gaussian_policy_forward(x, params, eps, output_limit=1.0, block_b=256):
    """Full ReparamGaussianPolicy forward in one gridded Pallas kernel.

    x:   (B, input_size) float32
    eps: (B, output_size) float32 standard-normal noise (the rsample noise)
    params: dict with w1 (I,H1), b1 (1,H1), w2 (H1,H2), b2 (1,H2),
            wmu/wls (H2,A), bmu/bls (1,A)   [weights stored as (in, out)]
    Returns (mu, pi, log_pi) with shapes (B,A), (B,A), (B,).
    """
    B, in_dim = x.shape
    H1 = params["w1"].shape[1]
    H2 = params["w2"].shape[1]
    A = params["wmu"].shape[1]

    in_pad = _round_up(in_dim, 128)
    h1_pad = _round_up(H1, 128)
    h2_pad = _round_up(H2, 128)
    a_pad = _round_up(A, 128)

    tb = min(block_b, _round_up(B, 8))
    b_pad = _round_up(B, tb)
    out_w = 2 * a_pad + 128  # lane-dense packed output slab

    def pad2(a, r, c):
        a = jnp.asarray(a, jnp.float32)
        return jnp.pad(a, ((0, r - a.shape[0]), (0, c - a.shape[1])))

    xp = pad2(x, b_pad, in_pad)
    epsp = pad2(eps, b_pad, a_pad)
    w1 = pad2(params["w1"], in_pad, h1_pad)
    b1 = pad2(params["b1"], 1, h1_pad)
    w2 = pad2(params["w2"], h1_pad, h2_pad)
    b2 = pad2(params["b2"], 1, h2_pad)
    # Fuse the two heads into a single (H2_pad, 2*A_pad) weight / (1, 2*A_pad) bias.
    wh = jnp.concatenate([pad2(params["wmu"], h2_pad, a_pad),
                          pad2(params["wls"], h2_pad, a_pad)], axis=1)
    bh = jnp.concatenate([pad2(params["bmu"], 1, a_pad),
                          pad2(params["bls"], 1, a_pad)], axis=1)

    kernel = functools.partial(_policy_kernel, a_dim=A, a_pad=a_pad,
                               output_limit=float(output_limit))

    out = pl.pallas_call(
        kernel,
        out_shape=jax.ShapeDtypeStruct((b_pad, out_w), jnp.float32),
        grid_spec=pltpu.PrefetchScalarGridSpec(
            num_scalar_prefetch=0,
            grid=(b_pad // tb,),
            in_specs=[
                pl.BlockSpec((tb, in_pad), lambda i: (i, 0)),         # x tile
                pl.BlockSpec((in_pad, h1_pad), lambda i: (0, 0)),     # w1 (resident)
                pl.BlockSpec((1, h1_pad), lambda i: (0, 0)),          # b1
                pl.BlockSpec((h1_pad, h2_pad), lambda i: (0, 0)),     # w2
                pl.BlockSpec((1, h2_pad), lambda i: (0, 0)),          # b2
                pl.BlockSpec((h2_pad, 2 * a_pad), lambda i: (0, 0)),  # fused head W
                pl.BlockSpec((1, 2 * a_pad), lambda i: (0, 0)),       # fused head b
                pl.BlockSpec((tb, a_pad), lambda i: (i, 0)),          # eps tile
            ],
            out_specs=pl.BlockSpec((tb, out_w), lambda i: (i, 0)),
        ),
        compiler_params=pltpu.CompilerParams(
            dimension_semantics=("parallel",)),
    )(xp, w1, b1, w2, b2, wh, bh, epsp)

    mu = out[:B, :A]
    pi = out[:B, a_pad:a_pad + A]
    log_pi = out[:B, 2 * a_pad]
    return mu, pi, log_pi


def init_params(key, input_size, hidden_sizes, output_size):
    """Parameter init mirroring the module's shapes.

    Hidden layers: orthogonal(gain=0.1) weights, zero bias (as in `init(...)`);
    mu / log_std heads: PyTorch-default-like uniform init.
    Weights are stored as (in_features, out_features) so the kernel computes x @ W + b.
    """
    keys = jax.random.split(key, 4)
    orth = jax.nn.initializers.orthogonal(scale=0.1)
    h1, h2 = hidden_sizes

    w1 = orth(keys[0], (input_size, h1), jnp.float32)
    b1 = jnp.zeros((1, h1), jnp.float32)
    w2 = orth(keys[1], (h1, h2), jnp.float32)
    b2 = jnp.zeros((1, h2), jnp.float32)

    lim = 1.0 / jnp.sqrt(jnp.float32(h2))
    wmu = jax.random.uniform(keys[2], (h2, output_size), jnp.float32, -lim, lim)
    bmu = jnp.zeros((1, output_size), jnp.float32)
    wls = jax.random.uniform(keys[3], (h2, output_size), jnp.float32, -lim, lim)
    bls = jnp.zeros((1, output_size), jnp.float32)

    return dict(w1=w1, b1=b1, w2=w2, b2=b2, wmu=wmu, bmu=bmu, wls=wls, bls=bls)


def _reference_forward(x, p, eps, output_limit=1.0):
    """Pure-JAX reference (mirrors the PyTorch module) for correctness checking."""
    h1 = jax.nn.relu(x @ p["w1"] + p["b1"])
    h2 = jax.nn.relu(h1 @ p["w2"] + p["b2"])
    mu = h2 @ p["wmu"] + p["bmu"]
    log_std = jnp.tanh(h2 @ p["wls"] + p["bls"])
    log_std = LOG_STD_MIN + 0.5 * (LOG_STD_MAX - LOG_STD_MIN) * (log_std + 1.0)
    std = jnp.exp(log_std)
    pi = mu + std * eps
    log_prob = -((pi - mu) ** 2) / (2.0 * std * std) - log_std - 0.5 * jnp.log(2.0 * jnp.pi)
    log_pi = jnp.sum(log_prob, axis=-1)
    mu_t, pi_t = jnp.tanh(mu), jnp.tanh(pi)
    log_pi = log_pi - jnp.sum(
        jnp.log(jnp.clip(1.0 - pi_t * pi_t, 0.0, 1.0) + 1e-6), axis=-1)
    return mu_t * output_limit, pi_t * output_limit, log_pi


if __name__ == "__main__":
    batch = 8
    input_size = 16
    hidden_sizes = (64, 64)
    output_size = 8
    output_limit = 1.0

    key = jax.random.PRNGKey(0)
    k_x, k_p, k_eps = jax.random.split(key, 3)

    x = jax.random.normal(k_x, (batch, input_size), dtype=jnp.float32)
    params = init_params(k_p, input_size, hidden_sizes, output_size)
    eps = jax.random.normal(k_eps, (batch, output_size), dtype=jnp.float32)

    mu, pi, log_pi = reparam_gaussian_policy_forward(x, params, eps, output_limit)
    jax.block_until_ready((mu, pi, log_pi))

    mu_r, pi_r, log_pi_r = _reference_forward(x, params, eps, output_limit)
    assert mu.shape == (batch, output_size)
    assert pi.shape == (batch, output_size)
    assert log_pi.shape == (batch,)
    assert jnp.allclose(mu, mu_r, atol=1e-5, rtol=1e-5)
    assert jnp.allclose(pi, pi_r, atol=1e-5, rtol=1e-5)
    assert jnp.allclose(log_pi, log_pi_r, atol=1e-4, rtol=1e-4)

    print("KERNEL_OK")
</pallas_src>

<mosaic_0001>
module attributes {stable_mosaic.version = 11 : i64} {
  func.func @_policy_kernel(%arg0: i32, %arg1: memref<8x128xf32, #tpu.memory_space<vmem>>, %arg2: memref<128x128xf32, #tpu.memory_space<vmem>>, %arg3: memref<1x128xf32, #tpu.memory_space<vmem>>, %arg4: memref<128x128xf32, #tpu.memory_space<vmem>>, %arg5: memref<1x128xf32, #tpu.memory_space<vmem>>, %arg6: memref<128x256xf32, #tpu.memory_space<vmem>>, %arg7: memref<1x256xf32, #tpu.memory_space<vmem>>, %arg8: memref<8x128xf32, #tpu.memory_space<vmem>>, %arg9: memref<8x384xf32, #tpu.memory_space<vmem>>) attributes {dimension_semantics = [#tpu.dimension_semantics<parallel>], iteration_bounds = array<i64: 1>, scalar_prefetch = 0 : i64, scratch_operands = 0 : i64, tpu.core_type = #tpu.core_type<tc>, window_params = [{transform_indices = @transform_0, window_bounds = array<i64: 8, 128>}, {pipeline_mode = #tpu.pipeline_mode<synchronous>, transform_indices = @transform_1, window_bounds = array<i64: 128, 128>}, {pipeline_mode = #tpu.pipeline_mode<synchronous>, transform_indices = @transform_2, window_bounds = array<i64: 1, 128>}, {pipeline_mode = #tpu.pipeline_mode<synchronous>, transform_indices = @transform_3, window_bounds = array<i64: 128, 128>}, {pipeline_mode = #tpu.pipeline_mode<synchronous>, transform_indices = @transform_4, window_bounds = array<i64: 1, 128>}, {pipeline_mode = #tpu.pipeline_mode<synchronous>, transform_indices = @transform_5, window_bounds = array<i64: 128, 256>}, {pipeline_mode = #tpu.pipeline_mode<synchronous>, transform_indices = @transform_6, window_bounds = array<i64: 1, 256>}, {transform_indices = @transform_7, window_bounds = array<i64: 8, 128>}, {transform_indices = @transform_8, window_bounds = array<i64: 8, 384>}]} {
    %c0 = arith.constant 0 : index
    %c0_0 = arith.constant 0 : index
    %0 = vector.load %arg1[%c0, %c0_0] : memref<8x128xf32, #tpu.memory_space<vmem>>, vector<8x128xf32>
    %c0_1 = arith.constant 0 : index
    %c0_2 = arith.constant 0 : index
    %1 = vector.load %arg2[%c0_1, %c0_2] : memref<128x128xf32, #tpu.memory_space<vmem>>, vector<128x128xf32>
    %cst = arith.constant dense<0.000000e+00> : vector<8x128xf32>
    %2 = tpu.matmul %0, %1, %cst {dimension_numbers = #tpu.dot_dimension_numbers<[1], [0], [0], [1], [0, 0, 1, 1], [], []>} : vector<8x128xf32>, vector<128x128xf32>, vector<8x128xf32> -> vector<8x128xf32>
    %c0_3 = arith.constant 0 : index
    %c0_4 = arith.constant 0 : index
    %3 = vector.load %arg3[%c0_3, %c0_4] : memref<1x128xf32, #tpu.memory_space<vmem>>, vector<1x128xf32>
    %4 = vector.broadcast %3 : vector<1x128xf32> to vector<8x128xf32>
    %5 = arith.addf %2, %4 : vector<8x128xf32>
    %cst_5 = arith.constant 0.000000e+00 : f32
    %6 = vector.broadcast %cst_5 : f32 to vector<8x128xf32>
    %7 = arith.maximumf %5, %6 : vector<8x128xf32>
    %c0_6 = arith.constant 0 : index
    %c0_7 = arith.constant 0 : index
    %8 = vector.load %arg4[%c0_6, %c0_7] : memref<128x128xf32, #tpu.memory_space<vmem>>, vector<128x128xf32>
    %cst_8 = arith.constant dense<0.000000e+00> : vector<8x128xf32>
    %9 = tpu.matmul %7, %8, %cst_8 {dimension_numbers = #tpu.dot_dimension_numbers<[1], [0], [0], [1], [0, 0, 1, 1], [], []>} : vector<8x128xf32>, vector<128x128xf32>, vector<8x128xf32> -> vector<8x128xf32>
    %c0_9 = arith.constant 0 : index
    %c0_10 = arith.constant 0 : index
    %10 = vector.load %arg5[%c0_9, %c0_10] : memref<1x128xf32, #tpu.memory_space<vmem>>, vector<1x128xf32>
    %11 = vector.broadcast %10 : vector<1x128xf32> to vector<8x128xf32>
    %12 = arith.addf %9, %11 : vector<8x128xf32>
    %cst_11 = arith.constant 0.000000e+00 : f32
    %13 = vector.broadcast %cst_11 : f32 to vector<8x128xf32>
    %14 = arith.maximumf %12, %13 : vector<8x128xf32>
    %c0_12 = arith.constant 0 : index
    %c0_13 = arith.constant 0 : index
    %15 = vector.load %arg6[%c0_12, %c0_13] : memref<128x256xf32, #tpu.memory_space<vmem>>, vector<128x256xf32>
    %cst_14 = arith.constant dense<0.000000e+00> : vector<8x256xf32>
    %16 = tpu.matmul %14, %15, %cst_14 {dimension_numbers = #tpu.dot_dimension_numbers<[1], [0], [0], [1], [0, 0, 1, 1], [], []>} : vector<8x128xf32>, vector<128x256xf32>, vector<8x256xf32> -> vector<8x256xf32>
    %c0_15 = arith.constant 0 : index
    %c0_16 = arith.constant 0 : index
    %17 = vector.load %arg7[%c0_15, %c0_16] : memref<1x256xf32, #tpu.memory_space<vmem>>, vector<1x256xf32>
    %18 = vector.broadcast %17 : vector<1x256xf32> to vector<8x256xf32>
    %19 = arith.addf %16, %18 : vector<8x256xf32>
    %20 = vector.extract_strided_slice %19 {offsets = [0, 0], sizes = [8, 128], strides = [1, 1]} : vector<8x256xf32> to vector<8x128xf32>
    %21 = vector.extract_strided_slice %19 {offsets = [0, 128], sizes = [8, 128], strides = [1, 1]} : vector<8x256xf32> to vector<8x128xf32>
    %22 = math.tanh %21 : vector<8x128xf32>
    %cst_17 = arith.constant 1.000000e+00 : f32
    %23 = vector.broadcast %cst_17 : f32 to vector<8x128xf32>
    %24 = arith.addf %22, %23 : vector<8x128xf32>
    %cst_18 = arith.constant 1.100000e+01 : f32
    %25 = vector.broadcast %cst_18 : f32 to vector<8x128xf32>
    %26 = arith.mulf %25, %24 : vector<8x128xf32>
    %cst_19 = arith.constant -2.000000e+01 : f32
    %27 = vector.broadcast %cst_19 : f32 to vector<8x128xf32>
    %28 = arith.addf %27, %26 : vector<8x128xf32>
    %29 = math.exp %28 : vector<8x128xf32>
    %c0_20 = arith.constant 0 : index
    %c0_21 = arith.constant 0 : index
    %30 = vector.load %arg8[%c0_20, %c0_21] : memref<8x128xf32, #tpu.memory_space<vmem>>, vector<8x128xf32>
    %31 = arith.mulf %29, %30 : vector<8x128xf32>
    %32 = arith.addf %20, %31 : vector<8x128xf32>
    %33 = math.tanh %20 : vector<8x128xf32>
    %34 = math.tanh %32 : vector<8x128xf32>
    %35 = arith.mulf %34, %34 : vector<8x128xf32>
    %cst_22 = arith.constant 1.000000e+00 : f32
    %36 = vector.broadcast %cst_22 : f32 to vector<8x128xf32>
    %37 = arith.subf %36, %35 : vector<8x128xf32>
    %cst_23 = arith.constant 0.000000e+00 : f32
    %cst_24 = arith.constant 1.000000e+00 : f32
    %38 = vector.broadcast %cst_23 : f32 to vector<8x128xf32>
    %39 = arith.maximumf %38, %37 : vector<8x128xf32>
    %40 = vector.broadcast %cst_24 : f32 to vector<8x128xf32>
    %41 = arith.minimumf %40, %39 : vector<8x128xf32>
    %cst_25 = arith.constant -5.000000e-01 : f32
    %42 = vector.broadcast %cst_25 : f32 to vector<8x128xf32>
    %43 = arith.mulf %42, %30 : vector<8x128xf32>
    %44 = arith.mulf %43, %30 : vector<8x128xf32>
    %45 = arith.subf %44, %28 : vector<8x128xf32>
    %cst_26 = arith.constant 0.918938517 : f32
    %46 = vector.broadcast %cst_26 : f32 to vector<8x128xf32>
    %47 = arith.subf %45, %46 : vector<8x128xf32>
    %cst_27 = arith.constant 9.99999997E-7 : f32
    %48 = vector.broadcast %cst_27 : f32 to vector<8x128xf32>
    %49 = arith.addf %41, %48 : vector<8x128xf32>
    %50 = math.log %49 : vector<8x128xf32>
    %51 = arith.subf %47, %50 : vector<8x128xf32>
    %52 = tpu.iota {dimensions = array<i32: 1>} : vector<8x128xi32>
    %c8_i32 = arith.constant 8 : i32
    %53 = vector.broadcast %c8_i32 : i32 to vector<8x128xi32>
    %54 = arith.cmpi slt, %52, %53 : vector<8x128xi32>
    %cst_28 = arith.constant 0.000000e+00 : f32
    %55 = vector.broadcast %cst_28 : f32 to vector<8x128xf32>
    %56 = arith.select %54, %51, %55 : vector<8x128xi1>, vector<8x128xf32>
    %cst_29 = arith.constant dense<0.000000e+00> : vector<8xf32>
    %57 = vector.multi_reduction <add>, %56, %cst_29 [1] : vector<8x128xf32> to vector<8xf32>
    %58 = vector.shape_cast %57 : vector<8xf32> to vector<8x1xf32>
    %cst_30 = arith.constant 1.000000e+00 : f32
    %59 = vector.broadcast %cst_30 : f32 to vector<8x128xf32>
    %60 = arith.mulf %33, %59 : vector<8x128xf32>
    %c0_31 = arith.constant 0 : index
    %c0_32 = arith.constant 0 : index
    %61 = vector.load %arg9[%c0_31, %c0_32] : memref<8x384xf32, #tpu.memory_space<vmem>>, vector<8x128xf32>
    tpu.vector_store %arg9[%c0_31, %c0_32], %60 {strides = array<i32>} : memref<8x384xf32, #tpu.memory_space<vmem>>, vector<8x128xf32>,
    %cst_33 = arith.constant 1.000000e+00 : f32
    %62 = vector.broadcast %cst_33 : f32 to vector<8x128xf32>
    %63 = arith.mulf %34, %62 : vector<8x128xf32>
    %c0_34 = arith.constant 0 : index
    %c128 = arith.constant 128 : index
    %64 = vector.load %arg9[%c0_34, %c128] : memref<8x384xf32, #tpu.memory_space<vmem>>, vector<8x128xf32>
    tpu.vector_store %arg9[%c0_34, %c128], %63 {strides = array<i32>} : memref<8x384xf32, #tpu.memory_space<vmem>>, vector<8x128xf32>,
    %65 = vector.shape_cast %58 : vector<8x1xf32> to vector<8x1xf32>
    %66 = vector.broadcast %65 : vector<8x1xf32> to vector<8x128xf32>
    %c0_35 = arith.constant 0 : index
    %c256 = arith.constant 256 : index
    %67 = vector.load %arg9[%c0_35, %c256] : memref<8x384xf32, #tpu.memory_space<vmem>>, vector<8x128xf32>
    tpu.vector_store %arg9[%c0_35, %c256], %66 {strides = array<i32>} : memref<8x384xf32, #tpu.memory_space<vmem>>, vector<8x128xf32>,
    return
  }
  func.func @transform_0(%arg0: i32) -> (i32, i32) {
    %c0_i32 = arith.constant 0 : i32
    %c0_i32_0 = arith.constant 0 : i32
    return %arg0, %c0_i32 : i32, i32
  }
  func.func @transform_1(%arg0: i32) -> (i32, i32) {
    %c0_i32 = arith.constant 0 : i32
    %c0_i32_0 = arith.constant 0 : i32
    %c0_i32_1 = arith.constant 0 : i32
    return %c0_i32, %c0_i32_0 : i32, i32
  }
  func.func @transform_2(%arg0: i32) -> (i32, i32) {
    %c0_i32 = arith.constant 0 : i32
    %c0_i32_0 = arith.constant 0 : i32
    %c0_i32_1 = arith.constant 0 : i32
    return %c0_i32, %c0_i32_0 : i32, i32
  }
  func.func @transform_3(%arg0: i32) -> (i32, i32) {
    %c0_i32 = arith.constant 0 : i32
    %c0_i32_0 = arith.constant 0 : i32
    %c0_i32_1 = arith.constant 0 : i32
    return %c0_i32, %c0_i32_0 : i32, i32
  }
  func.func @transform_4(%arg0: i32) -> (i32, i32) {
    %c0_i32 = arith.constant 0 : i32
    %c0_i32_0 = arith.constant 0 : i32
    %c0_i32_1 = arith.constant 0 : i32
    return %c0_i32, %c0_i32_0 : i32, i32
  }
  func.func @transform_5(%arg0: i32) -> (i32, i32) {
    %c0_i32 = arith.constant 0 : i32
    %c0_i32_0 = arith.constant 0 : i32
    %c0_i32_1 = arith.constant 0 : i32
    return %c0_i32, %c0_i32_0 : i32, i32
  }
  func.func @transform_6(%arg0: i32) -> (i32, i32) {
    %c0_i32 = arith.constant 0 : i32
    %c0_i32_0 = arith.constant 0 : i32
    %c0_i32_1 = arith.constant 0 : i32
    return %c0_i32, %c0_i32_0 : i32, i32
  }
  func.func @transform_7(%arg0: i32) -> (i32, i32) {
    %c0_i32 = arith.constant 0 : i32
    %c0_i32_0 = arith.constant 0 : i32
    return %arg0, %c0_i32 : i32, i32
  }
  func.func @transform_8(%arg0: i32) -> (i32, i32) {
    %c0_i32 = arith.constant 0 : i32
    %c0_i32_0 = arith.constant 0 : i32
    return %arg0, %c0_i32 : i32, i32
  }
}

</mosaic_0001>

<llo_original>
// kernel: tpu_custom_call.1
$region0: #{tpu_custom_call.1}
  #allocation0 [shape = 'u32[]', space=smem, size = 0x4, offset = 0x4, fixed_abs, tag = 'smem constant byte address 0x4 - core index']
  #allocation1 [shape = 'u32[144,128]{1,0:T(1,128)}', space=vmem, size = 0x12000, scoped, tag = 'internal scratch']
  %s0 = inlined_call_operand.hbm [shape: f32[8,128], index: 0, kind: input, shape index: {}]
  %s1 = inlined_call_operand.hbm [shape: f32[128,128], index: 1, kind: input, shape index: {}]
  %s2 = inlined_call_operand.vmem [shape: f32[1,128], index: 2, kind: input, shape index: {}]
  %s3 = inlined_call_operand.hbm [shape: f32[128,128], index: 3, kind: input, shape index: {}]
  %s4 = inlined_call_operand.vmem [shape: f32[1,128], index: 4, kind: input, shape index: {}]
  %s5 = inlined_call_operand.hbm [shape: f32[128,256], index: 5, kind: input, shape index: {}]
  %s6 = inlined_call_operand.vmem [shape: f32[1,256], index: 6, kind: input, shape index: {}]
  %s7 = inlined_call_operand.vmem [shape: f32[8,128], index: 7, kind: input, shape index: {}]
  %s8 = inlined_call_operand.hbm [shape: f32[8,384], index: 8, kind: output, shape index: {}]
  %s9 = sld [smem:[#allocation0]]
  $region58: #{tpu_custom_call.1} parent=0
    _
  %s11 = ssub.s32 1, %s9
  %s12 = scalar_select 0, %s11, %s9
  $region1: #{tpu_custom_call.1} parent=0
    #allocation2 [shape = 'u8[4096]{0}', space=vmem, size = 0x1000, scoped, tag = 'input window, operand 0, single buffered']
    #allocation3 [shape = 's32[1]{0}', space=sflag, size = 0x4, scoped, tag = 'scoped memory for tpu_custom_call.1']
    #allocation4 [shape = 's32[1]{0}', space=sflag, size = 0x4, scoped, tag = 'scoped memory for tpu_custom_call.1']
    #allocation5 [shape = 'u8[65536]{0}', space=vmem, size = 0x10000, scoped, tag = 'input window, operand 1, single buffered']
    #allocation6 [shape = 's32[1]{0}', space=sflag, size = 0x4, scoped, tag = 'scoped memory for tpu_custom_call.1']
    #allocation7 [shape = 'u8[65536]{0}', space=vmem, size = 0x10000, scoped, tag = 'input window, operand 3, single buffered']
    #allocation8 [shape = 'u8[131072]{0}', space=vmem, size = 0x20000, scoped, tag = 'input window, operand 5, single buffered']
    #allocation9 [shape = 's32[1]{0}', space=sflag, size = 0x4, scoped, tag = 'scoped memory for tpu_custom_call.1']
    #allocation10 [shape = 'u8[12288]{0}', space=vmem, size = 0x3000, scoped, tag = 'output window, operand 0, single buffered']
    %13 = vsyncpa [#allocation3], 0
    %14 = vsyncpa [#allocation6], 0
    %15 = vsyncpa [#allocation9], 0
    %16 = vsyncpa [#allocation4], 0
    // Predicated region
    $region2: #{tpu_custom_call.1} parent=1 // pred_check
      _
    $region3: #{tpu_custom_call.1} parent=1 // pred_check_branch
      %18 = sbr.rel (0) target = $region5
    $region4: #{tpu_custom_call.1} parent=1 // pred_region
      %s20 = ssub.s32 128, 128
      %21 = vsyncadd [#allocation3], %s20
      %s23 = sshll.u32 [#allocation2], 4
      %s24 = int_to_ptr.vmem [resolvable:$true] %s23
      %26 = dma.hbm_to_vmem [thread:$0]  %s0, 128, %s24, [#allocation3]
    $region5: #{tpu_custom_call.1} parent=1 // pred_fallthru
      _
    // Predicated region
    $region6: #{tpu_custom_call.1} parent=1 // pred_check
      _
    $region7: #{tpu_custom_call.1} parent=1 // pred_check_branch
      %28 = sbr.rel (0) target = $region9
    $region8: #{tpu_custom_call.1} parent=1 // pred_region
      %s30 = ssub.s32 2048, 2048
      %31 = vsyncadd [#allocation6], %s30
      %s32 = sshll.u32 [#allocation5], 4
      %s33 = int_to_ptr.vmem [resolvable:$true] %s32
      %38 = dma.hbm_to_vmem [thread:$0]  %s1, 2048, %s33, [#allocation6], 128, 128, 8
    $region9: #{tpu_custom_call.1} parent=1 // pred_fallthru
      _
    // Predicated region
    $region10: #{tpu_custom_call.1} parent=1 // pred_check
      _
    $region11: #{tpu_custom_call.1} parent=1 // pred_check_branch
      %40 = sbr.rel (0) target = $region13
    $region12: #{tpu_custom_call.1} parent=1 // pred_region
      _
    $region13: #{tpu_custom_call.1} parent=1 // pred_fallthru
      _
    // Predicated region
    $region14: #{tpu_custom_call.1} parent=1 // pred_check
      _
    $region15: #{tpu_custom_call.1} parent=1 // pred_check_branch
      %42 = sbr.rel (0) target = $region17
    $region16: #{tpu_custom_call.1} parent=1 // pred_region
      %s44 = ssub.s32 2048, 2048
      %45 = vsyncadd [#allocation6], %s44
      %s46 = sshll.u32 [#allocation7], 4
      %s47 = int_to_ptr.vmem [resolvable:$true] %s46
      %52 = dma.hbm_to_vmem [thread:$0]  %s3, 2048, %s47, [#allocation6], 128, 128, 8
    $region17: #{tpu_custom_call.1} parent=1 // pred_fallthru
      _
    // Predicated region
    $region18: #{tpu_custom_call.1} parent=1 // pred_check
      _
    $region19: #{tpu_custom_call.1} parent=1 // pred_check_branch
      %54 = sbr.rel (0) target = $region21
    $region20: #{tpu_custom_call.1} parent=1 // pred_region
      _
    $region21: #{tpu_custom_call.1} parent=1 // pred_fallthru
      _
    // Predicated region
    $region22: #{tpu_custom_call.1} parent=1 // pred_check
      _
    $region23: #{tpu_custom_call.1} parent=1 // pred_check_branch
      %56 = sbr.rel (0) target = $region25
    $region24: #{tpu_custom_call.1} parent=1 // pred_region
      %s58 = ssub.s32 4096, 4096
      %59 = vsyncadd [#allocation9], %s58
      %s60 = sshll.u32 [#allocation8], 4
      %s61 = int_to_ptr.vmem [resolvable:$true] %s60
      %66 = dma.hbm_to_vmem [thread:$0]  %s5, 4096, %s61, [#allocation9], 256, 256, 16
    $region25: #{tpu_custom_call.1} parent=1 // pred_fallthru
      _
    // Predicated region
    $region26: #{tpu_custom_call.1} parent=1 // pred_check
      _
    $region27: #{tpu_custom_call.1} parent=1 // pred_check_branch
      %68 = sbr.rel (0) target = $region29
    $region28: #{tpu_custom_call.1} parent=1 // pred_region
      _
    $region29: #{tpu_custom_call.1} parent=1 // pred_fallthru
      _
    // Predicated region
    $region30: #{tpu_custom_call.1} parent=1 // pred_check
      _
    $region31: #{tpu_custom_call.1} parent=1 // pred_check_branch
      %70 = sbr.rel (0) target = $region33
    $region32: #{tpu_custom_call.1} parent=1 // pred_region
      _
    $region33: #{tpu_custom_call.1} parent=1 // pred_fallthru
      _
    // Predicated region
    $region34: #{tpu_custom_call.1} parent=1 // pred_check
      _
    $region35: #{tpu_custom_call.1} parent=1 // pred_check_branch
      %72 = sbr.rel (0) target = $region37
    $region36: #{tpu_custom_call.1} parent=1 // pred_region
      %73 = dma.done [#allocation3], 128
    $region37: #{tpu_custom_call.1} parent=1 // pred_fallthru
      _
    // Predicated region
    $region38: #{tpu_custom_call.1} parent=1 // pred_check
      _
    $region39: #{tpu_custom_call.1} parent=1 // pred_check_branch
      %75 = sbr.rel (0) target = $region41
    $region40: #{tpu_custom_call.1} parent=1 // pred_region
      %76 = dma.done [#allocation6], 2048
    $region41: #{tpu_custom_call.1} parent=1 // pred_fallthru
      _
    // Predicated region
    $region42: #{tpu_custom_call.1} parent=1 // pred_check
      _
    $region43: #{tpu_custom_call.1} parent=1 // pred_check_branch
      %78 = sbr.rel (0) target = $region45
    $region44: #{tpu_custom_call.1} parent=1 // pred_region
      %79 = dma.done [#allocation6], 2048
    $region45: #{tpu_custom_call.1} parent=1 // pred_fallthru
      _
    // Predicated region
    $region46: #{tpu_custom_call.1} parent=1 // pred_check
      _
    $region47: #{tpu_custom_call.1} parent=1 // pred_check_branch
      %81 = sbr.rel (0) target = $region49
    $region48: #{tpu_custom_call.1} parent=1 // pred_region
      %82 = dma.done [#allocation9], 4096
    $region49: #{tpu_custom_call.1} parent=1 // pred_fallthru
      _
    %v83 = vld [vmem:[#allocation2] sm:$0xff]
    %v84 = vld [vmem:[#allocation5] sm:$0xff]
    %v85 = vld [vmem:[#allocation5 + $0x8] sm:$0xff]
    %v86 = vld [vmem:[#allocation5 + $0x10] sm:$0xff]
    %v87 = vld [vmem:[#allocation5 + $0x18] sm:$0xff]
    %v88 = vld [vmem:[#allocation5 + $0x20] sm:$0xff]
    %v89 = vld [vmem:[#allocation5 + $0x28] sm:$0xff]
    %v90 = vld [vmem:[#allocation5 + $0x30] sm:$0xff]
    %v91 = vld [vmem:[#allocation5 + $0x38] sm:$0xff]
    %v92 = vld [vmem:[#allocation5 + $0x40] sm:$0xff]
    %v93 = vld [vmem:[#allocation5 + $0x48] sm:$0xff]
    %v94 = vld [vmem:[#allocation5 + $0x50] sm:$0xff]
    %v95 = vld [vmem:[#allocation5 + $0x58] sm:$0xff]
    %v96 = vld [vmem:[#allocation5 + $0x60] sm:$0xff]
    %v97 = vld [vmem:[#allocation5 + $0x68] sm:$0xff]
    %v98 = vld [vmem:[#allocation5 + $0x70] sm:$0xff]
    %v99 = vld [vmem:[#allocation5 + $0x78] sm:$0xff]
    %v100 = vld [vmem:[%s2] sm:$0x1]
    %v102 = vlaneseq
    %v103 = vshrl.u32 %v102, 7
    %v104 = vsub.s32 0, %v103
    %v105 = vrot.slane %v100, %v104
    %107 = vmatprep.subr.mxu0 0.0
    %108 = vmatpush1.msra.mxu0 %v99
    %109 = vmatprep.subr.mxu0 0.0
    %110 = vmatpush1.msra.mxu0 %v98
    %111 = vmatprep.subr.mxu0 0.0
    %112 = vmatpush1.msra.mxu0 %v97
    %113 = vmatprep.subr.mxu0 0.0
    %114 = vmatpush1.msra.mxu0 %v96
    %115 = vmatprep.subr.mxu0 0.0
    %116 = vmatpush1.msra.mxu0 %v95
    %117 = vmatprep.subr.mxu0 0.0
    %118 = vmatpush1.msra.mxu0 %v94
    %119 = vmatprep.subr.mxu0 0.0
    %120 = vmatpush1.msra.mxu0 %v93
    %121 = vmatprep.subr.mxu0 0.0
    %122 = vmatpush1.msra.mxu0 %v92
    %123 = vmatprep.subr.mxu0 0.0
    %124 = vmatpush1.msra.mxu0 %v91
    %125 = vmatprep.subr.mxu0 0.0
    %126 = vmatpush1.msra.mxu0 %v90
    %127 = vmatprep.subr.mxu0 0.0
    %128 = vmatpush1.msra.mxu0 %v89
    %129 = vmatprep.subr.mxu0 0.0
    %130 = vmatpush1.msra.mxu0 %v88
    %131 = vmatprep.subr.mxu0 0.0
    %132 = vmatpush1.msra.mxu0 %v87
    %133 = vmatprep.subr.mxu0 0.0
    %134 = vmatpush1.msra.mxu0 %v86
    %135 = vmatprep.subr.mxu0 0.0
    %136 = vmatpush1.msra.mxu0 %v85
    %137 = vmatprep.subr.mxu0 0.0
    %138 = vmatpush1.msra.mxu0 %v84
    %139 = vmatprep.subr.mxu0 0.0
    %140 = vmatpush2.msra.mxu0 0.0
    %141 = vmatprep.subr.mxu0 0.0
    %142 = vmatpush2.msra.mxu0 0.0
    %143 = vmatprep.subr.mxu0 0.0
    %144 = vmatpush2.msra.mxu0 0.0
    %145 = vmatprep.subr.mxu0 0.0
    %146 = vmatpush2.msra.mxu0 0.0
    %147 = vmatprep.subr.mxu0 0.0
    %148 = vmatpush2.msra.mxu0 0.0
    %149 = vmatprep.subr.mxu0 0.0
    %150 = vmatpush2.msra.mxu0 0.0
    %151 = vmatprep.subr.mxu0 0.0
    %152 = vmatpush2.msra.mxu0 0.0
    %153 = vmatprep.subr.mxu0 0.0
    %154 = vmatpush2.msra.mxu0 0.0
    %155 = vmatprep.subr.mxu0 0.0
    %156 = vmatpush2.msra.mxu0 0.0
    %157 = vmatprep.subr.mxu0 0.0
    %158 = vmatpush2.msra.mxu0 0.0
    %159 = vmatprep.subr.mxu0 0.0
    %160 = vmatpush2.msra.mxu0 0.0
    %161 = vmatprep.subr.mxu0 0.0
    %162 = vmatpush2.msra.mxu0 0.0
    %163 = vmatprep.subr.mxu0 0.0
    %164 = vmatpush2.msra.mxu0 0.0
    %165 = vmatprep.subr.mxu0 0.0
    %166 = vmatpush2.msra.mxu0 0.0
    %167 = vmatprep.subr.mxu0 0.0
    %168 = vmatpush2.msra.mxu0 0.0
    %169 = vmatprep.subr.mxu0 0.0
    %170 = vmatpush2.msra.mxu0 0.0
    %171 = vmatprep.mubr.f32.mxu0 0.0
    %172 = vmatmul.mubr.f32.gmra.mxu0 %v83
    %v173 = vpop.f32.mrf.mxu0
    %v174 = vadd.f32 %v105, %v173
    %v175 = vpop.f32.mrf.mxu0
    %176 = vdwg.mxu0
    %v177 = vmax.f32 %v174, 0.0
    %v178 = vld [vmem:[#allocation7] sm:$0xff]
    %v179 = vld [vmem:[#allocation7 + $0x8] sm:$0xff]
    %v180 = vld [vmem:[#allocation7 + $0x10] sm:$0xff]
    %v181 = vld [vmem:[#allocation7 + $0x18] sm:$0xff]
    %v182 = vld [vmem:[#allocation7 + $0x20] sm:$0xff]
    %v183 = vld [vmem:[#allocation7 + $0x28] sm:$0xff]
    %v184 = vld [vmem:[#allocation7 + $0x30] sm:$0xff]
    %v185 = vld [vmem:[#allocation7 + $0x38] sm:$0xff]
    %v186 = vld [vmem:[#allocation7 + $0x40] sm:$0xff]
    %v187 = vld [vmem:[#allocation7 + $0x48] sm:$0xff]
    %v188 = vld [vmem:[#allocation7 + $0x50] sm:$0xff]
    %v189 = vld [vmem:[#allocation7 + $0x58] sm:$0xff]
    %v190 = vld [vmem:[#allocation7 + $0x60] sm:$0xff]
    %v191 = vld [vmem:[#allocation7 + $0x68] sm:$0xff]
    %v192 = vld [vmem:[#allocation7 + $0x70] sm:$0xff]
    %v193 = vld [vmem:[#allocation7 + $0x78] sm:$0xff]
    %v194 = vld [vmem:[%s4] sm:$0x1]
    %v196 = vlaneseq
    %v197 = vshrl.u32 %v196, 7
    %v198 = vsub.s32 0, %v197
    %v199 = vrot.slane %v194, %v198
    %201 = vmatprep.subr.mxu0 0.0
    %202 = vmatpush1.msra.mxu0 %v193
    %203 = vmatprep.subr.mxu0 0.0
    %204 = vmatpush1.msra.mxu0 %v192
    %205 = vmatprep.subr.mxu0 0.0
    %206 = vmatpush1.msra.mxu0 %v191
    %207 = vmatprep.subr.mxu0 0.0
    %208 = vmatpush1.msra.mxu0 %v190
    %209 = vmatprep.subr.mxu0 0.0
    %210 = vmatpush1.msra.mxu0 %v189
    %211 = vmatprep.subr.mxu0 0.0
    %212 = vmatpush1.msra.mxu0 %v188
    %213 = vmatprep.subr.mxu0 0.0
    %214 = vmatpush1.msra.mxu0 %v187
    %215 = vmatprep.subr.mxu0 0.0
    %216 = vmatpush1.msra.mxu0 %v186
    %217 = vmatprep.subr.mxu0 0.0
    %218 = vmatpush1.msra.mxu0 %v185
    %219 = vmatprep.subr.mxu0 0.0
    %220 = vmatpush1.msra.mxu0 %v184
    %221 = vmatprep.subr.mxu0 0.0
    %222 = vmatpush1.msra.mxu0 %v183
    %223 = vmatprep.subr.mxu0 0.0
    %224 = vmatpush1.msra.mxu0 %v182
    %225 = vmatprep.subr.mxu0 0.0
    %226 = vmatpush1.msra.mxu0 %v181
    %227 = vmatprep.subr.mxu0 0.0
    %228 = vmatpush1.msra.mxu0 %v180
    %229 = vmatprep.subr.mxu0 0.0
    %230 = vmatpush1.msra.mxu0 %v179
    %231 = vmatprep.subr.mxu0 0.0
    %232 = vmatpush1.msra.mxu0 %v178
    %233 = vmatprep.subr.mxu0 0.0
    %234 = vmatpush2.msra.mxu0 0.0
    %235 = vmatprep.subr.mxu0 0.0
    %236 = vmatpush2.msra.mxu0 0.0
    %237 = vmatprep.subr.mxu0 0.0
    %238 = vmatpush2.msra.mxu0 0.0
    %239 = vmatprep.subr.mxu0 0.0
    %240 = vmatpush2.msra.mxu0 0.0
    %241 = vmatprep.subr.mxu0 0.0
    %242 = vmatpush2.msra.mxu0 0.0
    %243 = vmatprep.subr.mxu0 0.0
    %244 = vmatpush2.msra.mxu0 0.0
    %245 = vmatprep.subr.mxu0 0.0
    %246 = vmatpush2.msra.mxu0 0.0
    %247 = vmatprep.subr.mxu0 0.0
    %248 = vmatpush2.msra.mxu0 0.0
    %249 = vmatprep.subr.mxu0 0.0
    %250 = vmatpush2.msra.mxu0 0.0
    %251 = vmatprep.subr.mxu0 0.0
    %252 = vmatpush2.msra.mxu0 0.0
    %253 = vmatprep.subr.mxu0 0.0
    %254 = vmatpush2.msra.mxu0 0.0
    %255 = vmatprep.subr.mxu0 0.0
    %256 = vmatpush2.msra.mxu0 0.0
    %257 = vmatprep.subr.mxu0 0.0
    %258 = vmatpush2.msra.mxu0 0.0
    %259 = vmatprep.subr.mxu0 0.0
    %260 = vmatpush2.msra.mxu0 0.0
    %261 = vmatprep.subr.mxu0 0.0
    %262 = vmatpush2.msra.mxu0 0.0
    %263 = vmatprep.subr.mxu0 0.0
    %264 = vmatpush2.msra.mxu0 0.0
    %265 = vmatprep.mubr.f32.mxu0 0.0
    %266 = vmatmul.mubr.f32.gmra.mxu0 %v177
    %v267 = vpop.f32.mrf.mxu0
    %v268 = vadd.f32 %v199, %v267
    %v269 = vpop.f32.mrf.mxu0
    %270 = vdwg.mxu0
    %v271 = vmax.f32 %v268, 0.0
    %v272 = vld [vmem:[#allocation8] sm:$0xff]
    %v273 = vld [vmem:[#allocation8 + $0x8] sm:$0xff]
    %v274 = vld [vmem:[#allocation8 + $0x10] sm:$0xff]
    %v275 = vld [vmem:[#allocation8 + $0x18] sm:$0xff]
    %v276 = vld [vmem:[#allocation8 + $0x20] sm:$0xff]
    %v277 = vld [vmem:[#allocation8 + $0x28] sm:$0xff]
    %v278 = vld [vmem:[#allocation8 + $0x30] sm:$0xff]
    %v279 = vld [vmem:[#allocation8 + $0x38] sm:$0xff]
    %v280 = vld [vmem:[#allocation8 + $0x40] sm:$0xff]
    %v281 = vld [vmem:[#allocation8 + $0x48] sm:$0xff]
    %v282 = vld [vmem:[#allocation8 + $0x50] sm:$0xff]
    %v283 = vld [vmem:[#allocation8 + $0x58] sm:$0xff]
    %v284 = vld [vmem:[#allocation8 + $0x60] sm:$0xff]
    %v285 = vld [vmem:[#allocation8 + $0x68] sm:$0xff]
    %v286 = vld [vmem:[#allocation8 + $0x70] sm:$0xff]
    %v287 = vld [vmem:[#allocation8 + $0x78] sm:$0xff]
    %v288 = vld [vmem:[#allocation8 + $0x80] sm:$0xff]
    %v289 = vld [vmem:[#allocation8 + $0x88] sm:$0xff]
    %v290 = vld [vmem:[#allocation8 + $0x90] sm:$0xff]
    %v291 = vld [vmem:[#allocation8 + $0x98] sm:$0xff]
    %v292 = vld [vmem:[#allocation8 + $0xa0] sm:$0xff]
    %v293 = vld [vmem:[#allocation8 + $0xa8] sm:$0xff]
    %v294 = vld [vmem:[#allocation8 + $0xb0] sm:$0xff]
    %v295 = vld [vmem:[#allocation8 + $0xb8] sm:$0xff]
    %v296 = vld [vmem:[#allocation8 + $0xc0] sm:$0xff]
    %v297 = vld [vmem:[#allocation8 + $0xc8] sm:$0xff]
    %v298 = vld [vmem:[#allocation8 + $0xd0] sm:$0xff]
    %v299 = vld [vmem:[#allocation8 + $0xd8] sm:$0xff]
    %v300 = vld [vmem:[#allocation8 + $0xe0] sm:$0xff]
    %v301 = vld [vmem:[#allocation8 + $0xe8] sm:$0xff]
    %v302 = vld [vmem:[#allocation8 + $0xf0] sm:$0xff]
    %v303 = vld [vmem:[#allocation8 + $0xf8] sm:$0xff]
    %v304 = vld [vmem:[%s6] sm:$0x3]
    %v306 = vlaneseq
    %v307 = vshrl.u32 %v306, 7
    %v308 = vsub.s32 0, %v307
    %v309 = vrot.slane %v304, %v308
    %v310 = vlaneseq
    %v311 = vshrl.u32 %v310, 7
    %v312 = vsub.s32 1, %v311
    %v313 = vrot.slane %v304, %v312
    %316 = vmatprep.subr.mxu0 %v303
    %317 = vmatpush1.msra.mxu0 %v302
    %318 = vmatprep.subr.mxu0 %v301
    %319 = vmatpush1.msra.mxu0 %v300
    %320 = vmatprep.subr.mxu0 %v299
    %321 = vmatpush1.msra.mxu0 %v298
    %322 = vmatprep.subr.mxu0 %v297
    %323 = vmatpush1.msra.mxu0 %v296
    %324 = vmatprep.subr.mxu0 %v295
    %325 = vmatpush1.msra.mxu0 %v294
    %326 = vmatprep.subr.mxu0 %v293
    %327 = vmatpush1.msra.mxu0 %v292
    %328 = vmatprep.subr.mxu0 %v291
    %329 = vmatpush1.msra.mxu0 %v290
    %330 = vmatprep.subr.mxu0 %v289
    %331 = vmatpush1.msra.mxu0 %v288
    %332 = vmatprep.subr.mxu0 %v287
    %333 = vmatpush1.msra.mxu0 %v286
    %334 = vmatprep.subr.mxu0 %v285
    %335 = vmatpush1.msra.mxu0 %v284
    %336 = vmatprep.subr.mxu0 %v283
    %337 = vmatpush1.msra.mxu0 %v282
    %338 = vmatprep.subr.mxu0 %v281
    %339 = vmatpush1.msra.mxu0 %v280
    %340 = vmatprep.subr.mxu0 %v279
    %341 = vmatpush1.msra.mxu0 %v278
    %342 = vmatprep.subr.mxu0 %v277
    %343 = vmatpush1.msra.mxu0 %v276
    %344 = vmatprep.subr.mxu0 %v275
    %345 = vmatpush1.msra.mxu0 %v274
    %346 = vmatprep.subr.mxu0 %v273
    %347 = vmatpush1.msra.mxu0 %v272
    %348 = vmatprep.subr.mxu0 0.0
    %349 = vmatpush2.msra.mxu0 0.0
    %350 = vmatprep.subr.mxu0 0.0
    %351 = vmatpush2.msra.mxu0 0.0
    %352 = vmatprep.subr.mxu0 0.0
    %353 = vmatpush2.msra.mxu0 0.0
    %354 = vmatprep.subr.mxu0 0.0
    %355 = vmatpush2.msra.mxu0 0.0
    %356 = vmatprep.subr.mxu0 0.0
    %357 = vmatpush2.msra.mxu0 0.0
    %358 = vmatprep.subr.mxu0 0.0
    %359 = vmatpush2.msra.mxu0 0.0
    %360 = vmatprep.subr.mxu0 0.0
    %361 = vmatpush2.msra.mxu0 0.0
    %362 = vmatprep.subr.mxu0 0.0
    %363 = vmatpush2.msra.mxu0 0.0
    %364 = vmatprep.subr.mxu0 0.0
    %365 = vmatpush2.msra.mxu0 0.0
    %366 = vmatprep.subr.mxu0 0.0
    %367 = vmatpush2.msra.mxu0 0.0
    %368 = vmatprep.subr.mxu0 0.0
    %369 = vmatpush2.msra.mxu0 0.0
    %370 = vmatprep.subr.mxu0 0.0
    %371 = vmatpush2.msra.mxu0 0.0
    %372 = vmatprep.subr.mxu0 0.0
    %373 = vmatpush2.msra.mxu0 0.0
    %374 = vmatprep.subr.mxu0 0.0
    %375 = vmatpush2.msra.mxu0 0.0
    %376 = vmatprep.subr.mxu0 0.0
    %377 = vmatpush2.msra.mxu0 0.0
    %378 = vmatprep.subr.mxu0 0.0
    %379 = vmatpush2.msra.mxu0 0.0
    %380 = vmatprep.mubr.f32.mxu0 0.0
    %381 = vmatmul.mubr.f32.gmra.mxu0 %v271
    %v382 = vpop.f32.mrf.mxu0
    %v383 = vadd.f32 %v309, %v382
    %v384 = vpop.f32.mrf.mxu0
    %v385 = vadd.f32 %v313, %v384
    %386 = vdwg.mxu0
    %v387 = vtanh.pop %v385
    %v388 = vadd.f32 %v387, 1.0
    %v389 = vmul.f32 %v388, 11.0
    %v390 = vadd.f32 %v389, -20.0
    %v391 = vmul.f32 %v390, 1.442695
    %v392 = vpow.pop %v391
    %v393 = vld [vmem:[%s7] sm:$0xff]
    %v394 = vmul.f32 %v392, %v393
    %v395 = vadd.f32 %v383, %v394
    %v396 = vtanh.pop %v383
    %v397 = vtanh.pop %v395
    %v398 = vmul.f32 %v397, %v397
    %v399 = vsub.f32 1.0, %v398
    %v400 = vmax.f32 %v399, 0.0
    %v401 = vmin.f32 %v400, 1.0
    %v402 = vmul.f32 %v393, -0.5
    %v403 = vmul.f32 %v402, %v393
    %v404 = vsub.f32 %v403, %v390
    %v405 = vsub.f32 %v404, 0.9189385
    %v406 = vadd.f32 %v401, 1e-06
    %v407 = vlog2.pop %v406
    %v408 = vmul.f32 %v407, 0.6931472
    %v409 = vsub.f32 %v405, %v408
    %v410 = vlaneseq
    %v411 = vand.u32 %v410, 127
    %vm412 = vcmp.lt.s32.totalorder %v411, 8
    %v413 = vsel %vm412, %v409, 0.0
    %414 = vadd.xlane.f32.xlu0 %v413
    %v415 = vpop.xlane.xlu0 %414
    %416 = vst [vmem:[#allocation10] sm:$0xff] %v396
    %417 = vst [vmem:[#allocation10 + $0x8] sm:$0xff] %v397
    %418 = vst [vmem:[#allocation10 + $0x10] sm:$0xff] %v415
    // Predicated region
    $region50: #{tpu_custom_call.1} parent=1 // pred_check
      _
    $region51: #{tpu_custom_call.1} parent=1 // pred_check_branch
      %420 = sbr.rel (0) target = $region53
    $region52: #{tpu_custom_call.1} parent=1 // pred_region
      %s422 = ssub.s32 384, 384
      %423 = vsyncadd [#allocation4], %s422
      %s425 = sshll.u32 [#allocation10], 4
      %s426 = int_to_ptr.vmem [resolvable:$true] %s425
      %428 = dma.vmem_to_hbm [thread:$0]  %s426, 384, %s8, [#allocation4]
    $region53: #{tpu_custom_call.1} parent=1 // pred_fallthru
      _
    // Predicated region
    $region54: #{tpu_custom_call.1} parent=1 // pred_check
      _
    $region55: #{tpu_custom_call.1} parent=1 // pred_check_branch
      %430 = sbr.rel (0) target = $region57
    $region56: #{tpu_custom_call.1} parent=1 // pred_region
      %431 = dma.done [#allocation4], 384
    $region57: #{tpu_custom_call.1} parent=1 // pred_fallthru
      _
    %432 = vsyncpa [#allocation3], 1
    %433 = vsyncpa [#allocation6], 1
    %434 = vsyncpa [#allocation9], 1
    %435 = vsyncpa [#allocation4], 1

</llo_original>
